<compile_context>
chip_gen: v6e
topology: v6e:2x2x1
jax: 0.10.0
libtpu: 0.0.40
codegen_flags: <defaults>
</compile_context>

<pallas_src>
import math
import functools

import jax
import jax.numpy as jnp
from jax.experimental import pallas as pl
from jax.experimental.pallas import tpu as pltpu

LANE = 128


def _round_up(n, m):
    return ((n + m - 1) // m) * m


def _relu6(v):
    # torch.nn.ReLU6(x) == clamp(x, 0, 6)
    return jnp.clip(v, 0.0, 6.0)


def _policy_mlp_kernel(x_ref, w1_ref, b1_ref, w2_ref, b2_ref,
                       w3_ref, b3_ref, w4_ref, b4_ref, out_ref):
    # x: (TILE_B, 128) zero-padded input tile (real features in the first lanes).
    x = x_ref[...]

    # fc1 / fc2: lane-dense 128x128 MXU matmuls; (1, 128) bias broadcasts in the add.
    h1 = _relu6(jnp.dot(x, w1_ref[...], preferred_element_type=jnp.float32) + b1_ref[...])
    h2 = _relu6(jnp.dot(h1, w2_ref[...], preferred_element_type=jnp.float32) + b2_ref[...])

    # fc3 (128 -> 1): degenerate N=1 matmul replaced by VPU multiply + XLU lane reduce.
    # w3_ref is the fc3 weight column stored as a (1, 128) row; b3_ref is (1, 1).
    h3 = _relu6(jnp.sum(h2 * w3_ref[...], axis=-1, keepdims=True) + b3_ref[...])  # (TILE_B, 1)

    # fc4 (1 -> out): degenerate K=1 matmul replaced by a broadcast outer product on the VPU.
    out_ref[...] = (h3 * w4_ref[...] + b4_ref[...]).astype(out_ref.dtype)


def pad_params(params):
    """Zero-pad every feature dim to the 128-lane tile so the kernel is lane-dense.

    Padded weight rows/cols and padded bias entries are zero, so the padded
    network computes exactly the same values in the "real" lanes
    (relu6(0) == 0, and zero rows contribute nothing downstream).
    """
    in_dims, fc1 = params["w1"].shape
    _, fc2 = params["w2"].shape
    _, fc3 = params["w3"].shape
    _, out_dims = params["w4"].shape
    assert fc3 == 1, "kernel specializes the module default fc3_dims == 1"

    def pad2(a, rows, cols):
        return jnp.pad(a, ((0, rows - a.shape[0]), (0, cols - a.shape[1])))

    K = _round_up(in_dims, LANE)
    H1 = _round_up(fc1, LANE)
    H2 = _round_up(fc2, LANE)
    O = _round_up(out_dims, LANE)

    return {
        "w1": pad2(params["w1"], K, H1),
        "b1": pad2(params["b1"], 1, H1),
        "w2": pad2(params["w2"], H1, H2),
        "b2": pad2(params["b2"], 1, H2),
        # fc3 weight column stored as a (1, H2) row for the VPU dot-reduce.
        "w3": pad2(params["w3"].T, 1, H2),
        "b3": params["b3"].reshape(1, 1).astype(jnp.float32),
        "w4": pad2(params["w4"], 1, O),
        "b4": pad2(params["b4"], 1, O),
        "in_dims": in_dims,
        "out_dims": out_dims,
    }


def policy_network_forward(x, pp, tile_b=None):
    """x: (B, input_dims) float32. pp: output of pad_params()."""
    B, in_dims = x.shape
    K, H1 = pp["w1"].shape
    H2 = pp["w2"].shape[1]
    O = pp["w4"].shape[1]
    out_dims = pp["out_dims"]
    assert in_dims == pp["in_dims"]

    # Batch tile: multiple of 8 sublanes; capped so tiny batches stay one step,
    # and 512 rows keeps double-buffered x/out well inside v7x's 32 MiB scoped VMEM.
    if tile_b is None:
        tile_b = min(512, _round_up(B, 8))
    B_pad = _round_up(B, tile_b)

    x_pad = jnp.pad(x.astype(jnp.float32), ((0, B_pad - B), (0, K - in_dims)))

    out = pl.pallas_call(
        _policy_mlp_kernel,
        out_shape=jax.ShapeDtypeStruct((B_pad, O), jnp.float32),
        grid=(B_pad // tile_b,),
        in_specs=[
            # activations: tiled over the batch axis
            pl.BlockSpec((tile_b, K), lambda i: (i, 0)),
            # weights / biases: constant block index -> resident in VMEM across iterations
            pl.BlockSpec((K, H1), lambda i: (0, 0)),
            pl.BlockSpec((1, H1), lambda i: (0, 0)),
            pl.BlockSpec((H1, H2), lambda i: (0, 0)),
            pl.BlockSpec((1, H2), lambda i: (0, 0)),
            pl.BlockSpec((1, H2), lambda i: (0, 0)),
            pl.BlockSpec((1, 1), lambda i: (0, 0)),
            pl.BlockSpec((1, O), lambda i: (0, 0)),
            pl.BlockSpec((1, O), lambda i: (0, 0)),
        ],
        out_specs=pl.BlockSpec((tile_b, O), lambda i: (i, 0)),
        compiler_params=pltpu.CompilerParams(
            dimension_semantics=("parallel",)),
    )(x_pad, pp["w1"], pp["b1"], pp["w2"], pp["b2"],
      pp["w3"], pp["b3"], pp["w4"], pp["b4"])

    # Slice the lane-dense output slab back to the real shape.
    return out[:B, :out_dims]


def xavier_uniform(key, fan_in, fan_out):
    # matches torch.nn.init.xavier_uniform_ with gain=1; stored (in, out) so kernel does x @ W.
    limit = math.sqrt(6.0 / (fan_in + fan_out))
    return jax.random.uniform(key, (fan_in, fan_out), dtype=jnp.float32,
                              minval=-limit, maxval=limit)


def make_params(key, input_dims=3, output_dims=3, fc1=100, fc2=100, fc3=1):
    k1, k2, k3, k4 = jax.random.split(key, 4)
    return {
        "w1": xavier_uniform(k1, input_dims, fc1),
        "b1": jnp.full((1, fc1), 0.003, dtype=jnp.float32),
        "w2": xavier_uniform(k2, fc1, fc2),
        "b2": jnp.full((1, fc2), 0.003, dtype=jnp.float32),
        "w3": xavier_uniform(k3, fc2, fc3),
        "b3": jnp.full((1, fc3), 0.003, dtype=jnp.float32),
        "w4": xavier_uniform(k4, fc3, output_dims),
        "b4": jnp.full((1, output_dims), 0.003, dtype=jnp.float32),
    }


def reference_forward(x, p):
    dot = functools.partial(jnp.dot, precision=jax.lax.Precision.HIGHEST)
    h = jnp.clip(dot(x, p["w1"]) + p["b1"], 0.0, 6.0)
    h = jnp.clip(dot(h, p["w2"]) + p["b2"], 0.0, 6.0)
    h = jnp.clip(dot(h, p["w3"]) + p["b3"], 0.0, 6.0)
    return dot(h, p["w4"]) + p["b4"]


# TODO(synk): PolicyNetwork.guess_xs is a host-side autoregressive rollout; compose it by
#             calling policy_network_forward in a Python/lax loop rather than inside a kernel.

if __name__ == "__main__":
    key = jax.random.PRNGKey(0)
    kp, kx = jax.random.split(key)
    params = make_params(kp)
    padded = pad_params(params)

    B = 8  # small batch of unicycle states (x, y, theta)
    x = jax.random.normal(kx, (B, 3), dtype=jnp.float32)

    out = policy_network_forward(x, padded)
    out = jax.block_until_ready(out)

    ref = reference_forward(x, params)
    assert out.shape == (B, 3)
    assert jnp.allclose(out, ref, atol=1e-5, rtol=1e-5)

    print("KERNEL_OK")
</pallas_src>

<mosaic_0001>
module attributes {stable_mosaic.version = 11 : i64} {
  func.func @_policy_mlp_kernel(%arg0: i32, %arg1: memref<8x128xf32, #tpu.memory_space<vmem>>, %arg2: memref<128x128xf32, #tpu.memory_space<vmem>>, %arg3: memref<1x128xf32, #tpu.memory_space<vmem>>, %arg4: memref<128x128xf32, #tpu.memory_space<vmem>>, %arg5: memref<1x128xf32, #tpu.memory_space<vmem>>, %arg6: memref<1x128xf32, #tpu.memory_space<vmem>>, %arg7: memref<1x1xf32, #tpu.memory_space<vmem>>, %arg8: memref<1x128xf32, #tpu.memory_space<vmem>>, %arg9: memref<1x128xf32, #tpu.memory_space<vmem>>, %arg10: memref<8x128xf32, #tpu.memory_space<vmem>>) attributes {dimension_semantics = [#tpu.dimension_semantics<parallel>], iteration_bounds = array<i64: 1>, scalar_prefetch = 0 : i64, scratch_operands = 0 : i64, tpu.core_type = #tpu.core_type<tc>, window_params = [{transform_indices = @transform_0, window_bounds = array<i64: 8, 128>}, {pipeline_mode = #tpu.pipeline_mode<synchronous>, transform_indices = @transform_1, window_bounds = array<i64: 128, 128>}, {pipeline_mode = #tpu.pipeline_mode<synchronous>, transform_indices = @transform_2, window_bounds = array<i64: 1, 128>}, {pipeline_mode = #tpu.pipeline_mode<synchronous>, transform_indices = @transform_3, window_bounds = array<i64: 128, 128>}, {pipeline_mode = #tpu.pipeline_mode<synchronous>, transform_indices = @transform_4, window_bounds = array<i64: 1, 128>}, {pipeline_mode = #tpu.pipeline_mode<synchronous>, transform_indices = @transform_5, window_bounds = array<i64: 1, 128>}, {pipeline_mode = #tpu.pipeline_mode<synchronous>, transform_indices = @transform_6, window_bounds = array<i64: 1, 1>}, {pipeline_mode = #tpu.pipeline_mode<synchronous>, transform_indices = @transform_7, window_bounds = array<i64: 1, 128>}, {pipeline_mode = #tpu.pipeline_mode<synchronous>, transform_indices = @transform_8, window_bounds = array<i64: 1, 128>}, {transform_indices = @transform_9, window_bounds = array<i64: 8, 128>}]} {
    %c0 = arith.constant 0 : index
    %c0_0 = arith.constant 0 : index
    %0 = vector.load %arg1[%c0, %c0_0] : memref<8x128xf32, #tpu.memory_space<vmem>>, vector<8x128xf32>
    %c0_1 = arith.constant 0 : index
    %c0_2 = arith.constant 0 : index
    %1 = vector.load %arg2[%c0_1, %c0_2] : memref<128x128xf32, #tpu.memory_space<vmem>>, vector<128x128xf32>
    %cst = arith.constant dense<0.000000e+00> : vector<8x128xf32>
    %2 = tpu.matmul %0, %1, %cst {dimension_numbers = #tpu.dot_dimension_numbers<[1], [0], [0], [1], [0, 0, 1, 1], [], []>} : vector<8x128xf32>, vector<128x128xf32>, vector<8x128xf32> -> vector<8x128xf32>
    %c0_3 = arith.constant 0 : index
    %c0_4 = arith.constant 0 : index
    %3 = vector.load %arg3[%c0_3, %c0_4] : memref<1x128xf32, #tpu.memory_space<vmem>>, vector<1x128xf32>
    %4 = vector.broadcast %3 : vector<1x128xf32> to vector<8x128xf32>
    %5 = arith.addf %2, %4 : vector<8x128xf32>
    %cst_5 = arith.constant 0.000000e+00 : f32
    %cst_6 = arith.constant 6.000000e+00 : f32
    %6 = vector.broadcast %cst_5 : f32 to vector<8x128xf32>
    %7 = arith.maximumf %6, %5 : vector<8x128xf32>
    %8 = vector.broadcast %cst_6 : f32 to vector<8x128xf32>
    %9 = arith.minimumf %8, %7 : vector<8x128xf32>
    %c0_7 = arith.constant 0 : index
    %c0_8 = arith.constant 0 : index
    %10 = vector.load %arg4[%c0_7, %c0_8] : memref<128x128xf32, #tpu.memory_space<vmem>>, vector<128x128xf32>
    %cst_9 = arith.constant dense<0.000000e+00> : vector<8x128xf32>
    %11 = tpu.matmul %9, %10, %cst_9 {dimension_numbers = #tpu.dot_dimension_numbers<[1], [0], [0], [1], [0, 0, 1, 1], [], []>} : vector<8x128xf32>, vector<128x128xf32>, vector<8x128xf32> -> vector<8x128xf32>
    %c0_10 = arith.constant 0 : index
    %c0_11 = arith.constant 0 : index
    %12 = vector.load %arg5[%c0_10, %c0_11] : memref<1x128xf32, #tpu.memory_space<vmem>>, vector<1x128xf32>
    %13 = vector.broadcast %12 : vector<1x128xf32> to vector<8x128xf32>
    %14 = arith.addf %11, %13 : vector<8x128xf32>
    %cst_12 = arith.constant 0.000000e+00 : f32
    %cst_13 = arith.constant 6.000000e+00 : f32
    %15 = vector.broadcast %cst_12 : f32 to vector<8x128xf32>
    %16 = arith.maximumf %15, %14 : vector<8x128xf32>
    %17 = vector.broadcast %cst_13 : f32 to vector<8x128xf32>
    %18 = arith.minimumf %17, %16 : vector<8x128xf32>
    %c0_14 = arith.constant 0 : index
    %c0_15 = arith.constant 0 : index
    %19 = vector.load %arg6[%c0_14, %c0_15] : memref<1x128xf32, #tpu.memory_space<vmem>>, vector<1x128xf32>
    %20 = vector.broadcast %19 : vector<1x128xf32> to vector<8x128xf32>
    %21 = arith.mulf %18, %20 : vector<8x128xf32>
    %cst_16 = arith.constant dense<0.000000e+00> : vector<8xf32>
    %22 = vector.multi_reduction <add>, %21, %cst_16 [1] : vector<8x128xf32> to vector<8xf32>
    %23 = vector.shape_cast %22 : vector<8xf32> to vector<8x1xf32>
    %c0_17 = arith.constant 0 : index
    %c0_18 = arith.constant 0 : index
    %24 = vector.load %arg7[%c0_17, %c0_18] : memref<1x1xf32, #tpu.memory_space<vmem>>, vector<1x1xf32>
    %25 = vector.broadcast %24 : vector<1x1xf32> to vector<8x1xf32>
    %26 = arith.addf %23, %25 : vector<8x1xf32>
    %cst_19 = arith.constant 0.000000e+00 : f32
    %cst_20 = arith.constant 6.000000e+00 : f32
    %27 = vector.broadcast %cst_19 : f32 to vector<8x1xf32>
    %28 = arith.maximumf %27, %26 : vector<8x1xf32>
    %29 = vector.broadcast %cst_20 : f32 to vector<8x1xf32>
    %30 = arith.minimumf %29, %28 : vector<8x1xf32>
    %c0_21 = arith.constant 0 : index
    %c0_22 = arith.constant 0 : index
    %31 = vector.load %arg8[%c0_21, %c0_22] : memref<1x128xf32, #tpu.memory_space<vmem>>, vector<1x128xf32>
    %32 = vector.broadcast %30 : vector<8x1xf32> to vector<8x128xf32>
    %33 = vector.broadcast %31 : vector<1x128xf32> to vector<8x128xf32>
    %34 = arith.mulf %32, %33 : vector<8x128xf32>
    %c0_23 = arith.constant 0 : index
    %c0_24 = arith.constant 0 : index
    %35 = vector.load %arg9[%c0_23, %c0_24] : memref<1x128xf32, #tpu.memory_space<vmem>>, vector<1x128xf32>
    %36 = vector.broadcast %35 : vector<1x128xf32> to vector<8x128xf32>
    %37 = arith.addf %34, %36 : vector<8x128xf32>
    %c0_25 = arith.constant 0 : index
    %c0_26 = arith.constant 0 : index
    %38 = vector.load %arg10[%c0_25, %c0_26] : memref<8x128xf32, #tpu.memory_space<vmem>>, vector<8x128xf32>
    tpu.vector_store %arg10[%c0_25, %c0_26], %37 {strides = array<i32>} : memref<8x128xf32, #tpu.memory_space<vmem>>, vector<8x128xf32>,
    return
  }
  func.func @transform_0(%arg0: i32) -> (i32, i32) {
    %c0_i32 = arith.constant 0 : i32
    %c0_i32_0 = arith.constant 0 : i32
    return %arg0, %c0_i32 : i32, i32
  }
  func.func @transform_1(%arg0: i32) -> (i32, i32) {
    %c0_i32 = arith.constant 0 : i32
    %c0_i32_0 = arith.constant 0 : i32
    %c0_i32_1 = arith.constant 0 : i32
    return %c0_i32, %c0_i32_0 : i32, i32
  }
  func.func @transform_2(%arg0: i32) -> (i32, i32) {
    %c0_i32 = arith.constant 0 : i32
    %c0_i32_0 = arith.constant 0 : i32
    %c0_i32_1 = arith.constant 0 : i32
    return %c0_i32, %c0_i32_0 : i32, i32
  }
  func.func @transform_3(%arg0: i32) -> (i32, i32) {
    %c0_i32 = arith.constant 0 : i32
    %c0_i32_0 = arith.constant 0 : i32
    %c0_i32_1 = arith.constant 0 : i32
    return %c0_i32, %c0_i32_0 : i32, i32
  }
  func.func @transform_4(%arg0: i32) -> (i32, i32) {
    %c0_i32 = arith.constant 0 : i32
    %c0_i32_0 = arith.constant 0 : i32
    %c0_i32_1 = arith.constant 0 : i32
    return %c0_i32, %c0_i32_0 : i32, i32
  }
  func.func @transform_5(%arg0: i32) -> (i32, i32) {
    %c0_i32 = arith.constant 0 : i32
    %c0_i32_0 = arith.constant 0 : i32
    %c0_i32_1 = arith.constant 0 : i32
    return %c0_i32, %c0_i32_0 : i32, i32
  }
  func.func @transform_6(%arg0: i32) -> (i32, i32) {
    %c0_i32 = arith.constant 0 : i32
    %c0_i32_0 = arith.constant 0 : i32
    %c0_i32_1 = arith.constant 0 : i32
    return %c0_i32, %c0_i32_0 : i32, i32
  }
  func.func @transform_7(%arg0: i32) -> (i32, i32) {
    %c0_i32 = arith.constant 0 : i32
    %c0_i32_0 = arith.constant 0 : i32
    %c0_i32_1 = arith.constant 0 : i32
    return %c0_i32, %c0_i32_0 : i32, i32
  }
  func.func @transform_8(%arg0: i32) -> (i32, i32) {
    %c0_i32 = arith.constant 0 : i32
    %c0_i32_0 = arith.constant 0 : i32
    %c0_i32_1 = arith.constant 0 : i32
    return %c0_i32, %c0_i32_0 : i32, i32
  }
  func.func @transform_9(%arg0: i32) -> (i32, i32) {
    %c0_i32 = arith.constant 0 : i32
    %c0_i32_0 = arith.constant 0 : i32
    return %arg0, %c0_i32 : i32, i32
  }
}

</mosaic_0001>

<llo_original>
// kernel: tpu_custom_call.1
$region0: #{tpu_custom_call.1}
  #allocation0 [shape = 'u32[]', space=smem, size = 0x4, offset = 0x4, fixed_abs, tag = 'smem constant byte address 0x4 - core index']
  #allocation1 [shape = 'u32[144,128]{1,0:T(1,128)}', space=vmem, size = 0x12000, scoped, tag = 'internal scratch']
  #allocation2 [shape = 'f32[1,1]{1,0:T(1,128)S(1)}', space=vmem, size = 0x200, scoped, tag = 'scoped memory for tpu_custom_call.1']
  %s0 = inlined_call_operand.hbm [shape: f32[8,128], index: 0, kind: input, shape index: {}]
  %s1 = inlined_call_operand.hbm [shape: f32[128,128], index: 1, kind: input, shape index: {}]
  %s2 = inlined_call_operand.vmem [shape: f32[1,128], index: 2, kind: input, shape index: {}]
  %s3 = inlined_call_operand.hbm [shape: f32[128,128], index: 3, kind: input, shape index: {}]
  %s4 = inlined_call_operand.vmem [shape: f32[1,128], index: 4, kind: input, shape index: {}]
  %s5 = inlined_call_operand.vmem [shape: f32[1,128], index: 5, kind: input, shape index: {}]
  %s6 = inlined_call_operand.<no memory space> [shape: f32[1,1], index: 6, kind: input, shape index: {}]
  %s7 = inlined_call_operand.vmem [shape: f32[1,128], index: 7, kind: input, shape index: {}]
  %s8 = inlined_call_operand.vmem [shape: f32[1,128], index: 8, kind: input, shape index: {}]
  %s9 = inlined_call_operand.hbm [shape: f32[8,128], index: 9, kind: output, shape index: {}]
  %s10 = sld [smem:[#allocation0]]
  $region58: #{tpu_custom_call.1} parent=0
    _
  %s12 = ssub.s32 1, %s10
  %s13 = scalar_select 0, %s12, %s10
  %v14 = vstv %s6
  %15 = vst [vmem:[#allocation2] sm:$0x1] %v14
  $region1: #{tpu_custom_call.1} parent=0
    #allocation3 [shape = 'u8[4096]{0}', space=vmem, size = 0x1000, scoped, tag = 'input window, operand 0, single buffered']
    #allocation4 [shape = 's32[1]{0}', space=sflag, size = 0x4, scoped, tag = 'scoped memory for tpu_custom_call.1']
    #allocation5 [shape = 's32[1]{0}', space=sflag, size = 0x4, scoped, tag = 'scoped memory for tpu_custom_call.1']
    #allocation6 [shape = 'u8[65536]{0}', space=vmem, size = 0x10000, scoped, tag = 'input window, operand 1, single buffered']
    #allocation7 [shape = 's32[1]{0}', space=sflag, size = 0x4, scoped, tag = 'scoped memory for tpu_custom_call.1']
    #allocation8 [shape = 'u8[65536]{0}', space=vmem, size = 0x10000, scoped, tag = 'input window, operand 3, single buffered']
    #allocation9 [shape = 'u8[4096]{0}', space=vmem, size = 0x1000, scoped, tag = 'output window, operand 0, single buffered']
    %16 = vsyncpa [#allocation4], 0
    %17 = vsyncpa [#allocation7], 0
    %18 = vsyncpa [#allocation5], 0
    // Predicated region
    $region2: #{tpu_custom_call.1} parent=1 // pred_check
      _
    $region3: #{tpu_custom_call.1} parent=1 // pred_check_branch
      %20 = sbr.rel (0) target = $region5
    $region4: #{tpu_custom_call.1} parent=1 // pred_region
      %s22 = ssub.s32 128, 128
      %23 = vsyncadd [#allocation4], %s22
      %s25 = sshll.u32 [#allocation3], 4
      %s26 = int_to_ptr.vmem [resolvable:$true] %s25
      %28 = dma.hbm_to_vmem [thread:$0]  %s0, 128, %s26, [#allocation4]
    $region5: #{tpu_custom_call.1} parent=1 // pred_fallthru
      _
    // Predicated region
    $region6: #{tpu_custom_call.1} parent=1 // pred_check
      _
    $region7: #{tpu_custom_call.1} parent=1 // pred_check_branch
      %30 = sbr.rel (0) target = $region9
    $region8: #{tpu_custom_call.1} parent=1 // pred_region
      %s32 = ssub.s32 2048, 2048
      %33 = vsyncadd [#allocation7], %s32
      %s34 = sshll.u32 [#allocation6], 4
      %s35 = int_to_ptr.vmem [resolvable:$true] %s34
      %40 = dma.hbm_to_vmem [thread:$0]  %s1, 2048, %s35, [#allocation7], 128, 128, 8
    $region9: #{tpu_custom_call.1} parent=1 // pred_fallthru
      _
    // Predicated region
    $region10: #{tpu_custom_call.1} parent=1 // pred_check
      _
    $region11: #{tpu_custom_call.1} parent=1 // pred_check_branch
      %42 = sbr.rel (0) target = $region13
    $region12: #{tpu_custom_call.1} parent=1 // pred_region
      _
    $region13: #{tpu_custom_call.1} parent=1 // pred_fallthru
      _
    // Predicated region
    $region14: #{tpu_custom_call.1} parent=1 // pred_check
      _
    $region15: #{tpu_custom_call.1} parent=1 // pred_check_branch
      %44 = sbr.rel (0) target = $region17
    $region16: #{tpu_custom_call.1} parent=1 // pred_region
      %s46 = ssub.s32 2048, 2048
      %47 = vsyncadd [#allocation7], %s46
      %s48 = sshll.u32 [#allocation8], 4
      %s49 = int_to_ptr.vmem [resolvable:$true] %s48
      %54 = dma.hbm_to_vmem [thread:$0]  %s3, 2048, %s49, [#allocation7], 128, 128, 8
    $region17: #{tpu_custom_call.1} parent=1 // pred_fallthru
      _
    // Predicated region
    $region18: #{tpu_custom_call.1} parent=1 // pred_check
      _
    $region19: #{tpu_custom_call.1} parent=1 // pred_check_branch
      %56 = sbr.rel (0) target = $region21
    $region20: #{tpu_custom_call.1} parent=1 // pred_region
      _
    $region21: #{tpu_custom_call.1} parent=1 // pred_fallthru
      _
    // Predicated region
    $region22: #{tpu_custom_call.1} parent=1 // pred_check
      _
    $region23: #{tpu_custom_call.1} parent=1 // pred_check_branch
      %58 = sbr.rel (0) target = $region25
    $region24: #{tpu_custom_call.1} parent=1 // pred_region
      _
    $region25: #{tpu_custom_call.1} parent=1 // pred_fallthru
      _
    // Predicated region
    $region26: #{tpu_custom_call.1} parent=1 // pred_check
      _
    $region27: #{tpu_custom_call.1} parent=1 // pred_check_branch
      %60 = sbr.rel (0) target = $region29
    $region28: #{tpu_custom_call.1} parent=1 // pred_region
      _
    $region29: #{tpu_custom_call.1} parent=1 // pred_fallthru
      _
    // Predicated region
    $region30: #{tpu_custom_call.1} parent=1 // pred_check
      _
    $region31: #{tpu_custom_call.1} parent=1 // pred_check_branch
      %62 = sbr.rel (0) target = $region33
    $region32: #{tpu_custom_call.1} parent=1 // pred_region
      _
    $region33: #{tpu_custom_call.1} parent=1 // pred_fallthru
      _
    // Predicated region
    $region34: #{tpu_custom_call.1} parent=1 // pred_check
      _
    $region35: #{tpu_custom_call.1} parent=1 // pred_check_branch
      %64 = sbr.rel (0) target = $region37
    $region36: #{tpu_custom_call.1} parent=1 // pred_region
      _
    $region37: #{tpu_custom_call.1} parent=1 // pred_fallthru
      _
    // Predicated region
    $region38: #{tpu_custom_call.1} parent=1 // pred_check
      _
    $region39: #{tpu_custom_call.1} parent=1 // pred_check_branch
      %66 = sbr.rel (0) target = $region41
    $region40: #{tpu_custom_call.1} parent=1 // pred_region
      %67 = dma.done [#allocation4], 128
    $region41: #{tpu_custom_call.1} parent=1 // pred_fallthru
      _
    // Predicated region
    $region42: #{tpu_custom_call.1} parent=1 // pred_check
      _
    $region43: #{tpu_custom_call.1} parent=1 // pred_check_branch
      %69 = sbr.rel (0) target = $region45
    $region44: #{tpu_custom_call.1} parent=1 // pred_region
      %70 = dma.done [#allocation7], 2048
    $region45: #{tpu_custom_call.1} parent=1 // pred_fallthru
      _
    // Predicated region
    $region46: #{tpu_custom_call.1} parent=1 // pred_check
      _
    $region47: #{tpu_custom_call.1} parent=1 // pred_check_branch
      %72 = sbr.rel (0) target = $region49
    $region48: #{tpu_custom_call.1} parent=1 // pred_region
      %73 = dma.done [#allocation7], 2048
    $region49: #{tpu_custom_call.1} parent=1 // pred_fallthru
      _
    %v74 = vld [vmem:[#allocation3] sm:$0xff]
    %v75 = vld [vmem:[#allocation6] sm:$0xff]
    %v76 = vld [vmem:[#allocation6 + $0x8] sm:$0xff]
    %v77 = vld [vmem:[#allocation6 + $0x10] sm:$0xff]
    %v78 = vld [vmem:[#allocation6 + $0x18] sm:$0xff]
    %v79 = vld [vmem:[#allocation6 + $0x20] sm:$0xff]
    %v80 = vld [vmem:[#allocation6 + $0x28] sm:$0xff]
    %v81 = vld [vmem:[#allocation6 + $0x30] sm:$0xff]
    %v82 = vld [vmem:[#allocation6 + $0x38] sm:$0xff]
    %v83 = vld [vmem:[#allocation6 + $0x40] sm:$0xff]
    %v84 = vld [vmem:[#allocation6 + $0x48] sm:$0xff]
    %v85 = vld [vmem:[#allocation6 + $0x50] sm:$0xff]
    %v86 = vld [vmem:[#allocation6 + $0x58] sm:$0xff]
    %v87 = vld [vmem:[#allocation6 + $0x60] sm:$0xff]
    %v88 = vld [vmem:[#allocation6 + $0x68] sm:$0xff]
    %v89 = vld [vmem:[#allocation6 + $0x70] sm:$0xff]
    %v90 = vld [vmem:[#allocation6 + $0x78] sm:$0xff]
    %v91 = vld [vmem:[%s2] sm:$0x1]
    %v93 = vlaneseq
    %v94 = vshrl.u32 %v93, 7
    %v95 = vsub.s32 0, %v94
    %v96 = vrot.slane %v91, %v95
    %98 = vmatprep.subr.mxu0 0.0
    %99 = vmatpush1.msra.mxu0 %v90
    %100 = vmatprep.subr.mxu0 0.0
    %101 = vmatpush1.msra.mxu0 %v89
    %102 = vmatprep.subr.mxu0 0.0
    %103 = vmatpush1.msra.mxu0 %v88
    %104 = vmatprep.subr.mxu0 0.0
    %105 = vmatpush1.msra.mxu0 %v87
    %106 = vmatprep.subr.mxu0 0.0
    %107 = vmatpush1.msra.mxu0 %v86
    %108 = vmatprep.subr.mxu0 0.0
    %109 = vmatpush1.msra.mxu0 %v85
    %110 = vmatprep.subr.mxu0 0.0
    %111 = vmatpush1.msra.mxu0 %v84
    %112 = vmatprep.subr.mxu0 0.0
    %113 = vmatpush1.msra.mxu0 %v83
    %114 = vmatprep.subr.mxu0 0.0
    %115 = vmatpush1.msra.mxu0 %v82
    %116 = vmatprep.subr.mxu0 0.0
    %117 = vmatpush1.msra.mxu0 %v81
    %118 = vmatprep.subr.mxu0 0.0
    %119 = vmatpush1.msra.mxu0 %v80
    %120 = vmatprep.subr.mxu0 0.0
    %121 = vmatpush1.msra.mxu0 %v79
    %122 = vmatprep.subr.mxu0 0.0
    %123 = vmatpush1.msra.mxu0 %v78
    %124 = vmatprep.subr.mxu0 0.0
    %125 = vmatpush1.msra.mxu0 %v77
    %126 = vmatprep.subr.mxu0 0.0
    %127 = vmatpush1.msra.mxu0 %v76
    %128 = vmatprep.subr.mxu0 0.0
    %129 = vmatpush1.msra.mxu0 %v75
    %130 = vmatprep.subr.mxu0 0.0
    %131 = vmatpush2.msra.mxu0 0.0
    %132 = vmatprep.subr.mxu0 0.0
    %133 = vmatpush2.msra.mxu0 0.0
    %134 = vmatprep.subr.mxu0 0.0
    %135 = vmatpush2.msra.mxu0 0.0
    %136 = vmatprep.subr.mxu0 0.0
    %137 = vmatpush2.msra.mxu0 0.0
    %138 = vmatprep.subr.mxu0 0.0
    %139 = vmatpush2.msra.mxu0 0.0
    %140 = vmatprep.subr.mxu0 0.0
    %141 = vmatpush2.msra.mxu0 0.0
    %142 = vmatprep.subr.mxu0 0.0
    %143 = vmatpush2.msra.mxu0 0.0
    %144 = vmatprep.subr.mxu0 0.0
    %145 = vmatpush2.msra.mxu0 0.0
    %146 = vmatprep.subr.mxu0 0.0
    %147 = vmatpush2.msra.mxu0 0.0
    %148 = vmatprep.subr.mxu0 0.0
    %149 = vmatpush2.msra.mxu0 0.0
    %150 = vmatprep.subr.mxu0 0.0
    %151 = vmatpush2.msra.mxu0 0.0
    %152 = vmatprep.subr.mxu0 0.0
    %153 = vmatpush2.msra.mxu0 0.0
    %154 = vmatprep.subr.mxu0 0.0
    %155 = vmatpush2.msra.mxu0 0.0
    %156 = vmatprep.subr.mxu0 0.0
    %157 = vmatpush2.msra.mxu0 0.0
    %158 = vmatprep.subr.mxu0 0.0
    %159 = vmatpush2.msra.mxu0 0.0
    %160 = vmatprep.subr.mxu0 0.0
    %161 = vmatpush2.msra.mxu0 0.0
    %162 = vmatprep.mubr.f32.mxu0 0.0
    %163 = vmatmul.mubr.f32.gmra.mxu0 %v74
    %v164 = vpop.f32.mrf.mxu0
    %v165 = vadd.f32 %v96, %v164
    %v166 = vpop.f32.mrf.mxu0
    %167 = vdwg.mxu0
    %v168 = vmax.f32 %v165, 0.0
    %v169 = vmin.f32 %v168, 6.0
    %v170 = vld [vmem:[#allocation8] sm:$0xff]
    %v171 = vld [vmem:[#allocation8 + $0x8] sm:$0xff]
    %v172 = vld [vmem:[#allocation8 + $0x10] sm:$0xff]
    %v173 = vld [vmem:[#allocation8 + $0x18] sm:$0xff]
    %v174 = vld [vmem:[#allocation8 + $0x20] sm:$0xff]
    %v175 = vld [vmem:[#allocation8 + $0x28] sm:$0xff]
    %v176 = vld [vmem:[#allocation8 + $0x30] sm:$0xff]
    %v177 = vld [vmem:[#allocation8 + $0x38] sm:$0xff]
    %v178 = vld [vmem:[#allocation8 + $0x40] sm:$0xff]
    %v179 = vld [vmem:[#allocation8 + $0x48] sm:$0xff]
    %v180 = vld [vmem:[#allocation8 + $0x50] sm:$0xff]
    %v181 = vld [vmem:[#allocation8 + $0x58] sm:$0xff]
    %v182 = vld [vmem:[#allocation8 + $0x60] sm:$0xff]
    %v183 = vld [vmem:[#allocation8 + $0x68] sm:$0xff]
    %v184 = vld [vmem:[#allocation8 + $0x70] sm:$0xff]
    %v185 = vld [vmem:[#allocation8 + $0x78] sm:$0xff]
    %v186 = vld [vmem:[%s4] sm:$0x1]
    %v188 = vlaneseq
    %v189 = vshrl.u32 %v188, 7
    %v190 = vsub.s32 0, %v189
    %v191 = vrot.slane %v186, %v190
    %193 = vmatprep.subr.mxu0 0.0
    %194 = vmatpush1.msra.mxu0 %v185
    %195 = vmatprep.subr.mxu0 0.0
    %196 = vmatpush1.msra.mxu0 %v184
    %197 = vmatprep.subr.mxu0 0.0
    %198 = vmatpush1.msra.mxu0 %v183
    %199 = vmatprep.subr.mxu0 0.0
    %200 = vmatpush1.msra.mxu0 %v182
    %201 = vmatprep.subr.mxu0 0.0
    %202 = vmatpush1.msra.mxu0 %v181
    %203 = vmatprep.subr.mxu0 0.0
    %204 = vmatpush1.msra.mxu0 %v180
    %205 = vmatprep.subr.mxu0 0.0
    %206 = vmatpush1.msra.mxu0 %v179
    %207 = vmatprep.subr.mxu0 0.0
    %208 = vmatpush1.msra.mxu0 %v178
    %209 = vmatprep.subr.mxu0 0.0
    %210 = vmatpush1.msra.mxu0 %v177
    %211 = vmatprep.subr.mxu0 0.0
    %212 = vmatpush1.msra.mxu0 %v176
    %213 = vmatprep.subr.mxu0 0.0
    %214 = vmatpush1.msra.mxu0 %v175
    %215 = vmatprep.subr.mxu0 0.0
    %216 = vmatpush1.msra.mxu0 %v174
    %217 = vmatprep.subr.mxu0 0.0
    %218 = vmatpush1.msra.mxu0 %v173
    %219 = vmatprep.subr.mxu0 0.0
    %220 = vmatpush1.msra.mxu0 %v172
    %221 = vmatprep.subr.mxu0 0.0
    %222 = vmatpush1.msra.mxu0 %v171
    %223 = vmatprep.subr.mxu0 0.0
    %224 = vmatpush1.msra.mxu0 %v170
    %225 = vmatprep.subr.mxu0 0.0
    %226 = vmatpush2.msra.mxu0 0.0
    %227 = vmatprep.subr.mxu0 0.0
    %228 = vmatpush2.msra.mxu0 0.0
    %229 = vmatprep.subr.mxu0 0.0
    %230 = vmatpush2.msra.mxu0 0.0
    %231 = vmatprep.subr.mxu0 0.0
    %232 = vmatpush2.msra.mxu0 0.0
    %233 = vmatprep.subr.mxu0 0.0
    %234 = vmatpush2.msra.mxu0 0.0
    %235 = vmatprep.subr.mxu0 0.0
    %236 = vmatpush2.msra.mxu0 0.0
    %237 = vmatprep.subr.mxu0 0.0
    %238 = vmatpush2.msra.mxu0 0.0
    %239 = vmatprep.subr.mxu0 0.0
    %240 = vmatpush2.msra.mxu0 0.0
    %241 = vmatprep.subr.mxu0 0.0
    %242 = vmatpush2.msra.mxu0 0.0
    %243 = vmatprep.subr.mxu0 0.0
    %244 = vmatpush2.msra.mxu0 0.0
    %245 = vmatprep.subr.mxu0 0.0
    %246 = vmatpush2.msra.mxu0 0.0
    %247 = vmatprep.subr.mxu0 0.0
    %248 = vmatpush2.msra.mxu0 0.0
    %249 = vmatprep.subr.mxu0 0.0
    %250 = vmatpush2.msra.mxu0 0.0
    %251 = vmatprep.subr.mxu0 0.0
    %252 = vmatpush2.msra.mxu0 0.0
    %253 = vmatprep.subr.mxu0 0.0
    %254 = vmatpush2.msra.mxu0 0.0
    %255 = vmatprep.subr.mxu0 0.0
    %256 = vmatpush2.msra.mxu0 0.0
    %257 = vmatprep.mubr.f32.mxu0 0.0
    %258 = vmatmul.mubr.f32.gmra.mxu0 %v169
    %v259 = vpop.f32.mrf.mxu0
    %v260 = vadd.f32 %v191, %v259
    %v261 = vpop.f32.mrf.mxu0
    %262 = vdwg.mxu0
    %v263 = vmax.f32 %v260, 0.0
    %v264 = vmin.f32 %v263, 6.0
    %v265 = vld [vmem:[%s5] sm:$0x1]
    %v267 = vlaneseq
    %v268 = vshrl.u32 %v267, 7
    %v269 = vsub.s32 0, %v268
    %v270 = vrot.slane %v265, %v269
    %v272 = vmul.f32 %v264, %v270
    %273 = vadd.xlane.f32.xlu0 %v272
    %v274 = vpop.xlane.xlu0 %273
    %v275 = vld [vmem:[#allocation2] sm:$0x1]
    %v277 = vlaneseq
    %v278 = vshrl.u32 %v277, 7
    %v279 = vsub.s32 0, %v278
    %v280 = vrot.slane %v275, %v279
    %v282 = vadd.f32 %v274, %v280
    %v283 = vmax.f32 %v282, 0.0
    %v284 = vmin.f32 %v283, 6.0
    %v285 = vld [vmem:[%s7] sm:$0x1]
    %287 = vset.pattern.permute.xlu0 0
    %288 = vperm.xlu0 %287, %v284
    %v289 = vpop.permute.xlu0 %288
    %v292 = vlaneseq
    %v293 = vshrl.u32 %v292, 7
    %v294 = vsub.s32 0, %v293
    %v295 = vrot.slane %v285, %v294
    %v297 = vmul.f32 %v289, %v295
    %v298 = vld [vmem:[%s8] sm:$0x1]
    %v300 = vlaneseq
    %v301 = vshrl.u32 %v300, 7
    %v302 = vsub.s32 0, %v301
    %v303 = vrot.slane %v298, %v302
    %v305 = vadd.f32 %v297, %v303
    %306 = vst [vmem:[#allocation9] sm:$0xff] %v305
    // Predicated region
    $region50: #{tpu_custom_call.1} parent=1 // pred_check
      _
    $region51: #{tpu_custom_call.1} parent=1 // pred_check_branch
      %308 = sbr.rel (0) target = $region53
    $region52: #{tpu_custom_call.1} parent=1 // pred_region
      %s310 = ssub.s32 128, 128
      %311 = vsyncadd [#allocation5], %s310
      %s313 = sshll.u32 [#allocation9], 4
      %s314 = int_to_ptr.vmem [resolvable:$true] %s313
      %316 = dma.vmem_to_hbm [thread:$0]  %s314, 128, %s9, [#allocation5]
    $region53: #{tpu_custom_call.1} parent=1 // pred_fallthru
      _
    // Predicated region
    $region54: #{tpu_custom_call.1} parent=1 // pred_check
      _
    $region55: #{tpu_custom_call.1} parent=1 // pred_check_branch
      %318 = sbr.rel (0) target = $region57
    $region56: #{tpu_custom_call.1} parent=1 // pred_region
      %319 = dma.done [#allocation5], 128
    $region57: #{tpu_custom_call.1} parent=1 // pred_fallthru
      _
    %320 = vsyncpa [#allocation4], 1
    %321 = vsyncpa [#allocation7], 1
    %322 = vsyncpa [#allocation5], 1

</llo_original>
